<compile_context>
chip_gen: v7x
topology: tpu7x:2x2x1
jax: 0.10.0
libtpu: 0.0.40
codegen_flags: <defaults>
</compile_context>

<pallas_src>
import jax
import jax.numpy as jnp
from jax.experimental import pallas as pl
from jax.experimental.pallas import tpu as pltpu


def _add_pe_kernel(x_ref, pe_ref, o_ref):
    # x_ref : (tb, tc)   activation tile
    # pe_ref: (1,  tc)   positional-encoding row (broadcast over sublanes)
    # o_ref : (tb, tc)
    o_ref[...] = x_ref[...] + pe_ref[...]


def positional_encoding_forward(x: jax.Array, pe: jax.Array) -> jax.Array:
    """Pallas-backed equivalent of PositionalEncoding.forward: x + pe[:, :T, :]."""
    B, T, size = x.shape
    assert pe.ndim == 3 and pe.shape[0] == 1 and pe.shape[2] == size
    assert pe.shape[1] >= T, "sequence length exceeds num_pos"

    dtype = x.dtype
    itemsize = jnp.dtype(dtype).itemsize
    L = T * size

    # Lane-dense 2-D layout: rows = batch, lanes = T*size.
    x2 = x.reshape(B, L)
    pe_row = pe[:, :T, :].reshape(1, L).astype(dtype)

    # ---- tile selection ------------------------------------------------------
    # Row tile: full batch when small (block == full dim is always legal),
    # otherwise a large multiple of 8 so per-grid-step overhead (~0.35 us) is
    # amortized over a big tile.
    tb = B if B <= 512 else 512

    # Lane tile: full row if it fits an ~8 MiB/tile budget, else the largest
    # multiple of 128 that does.  8 MiB/tile keeps the double-buffered
    # (2 in + 2 out) tiles around 32 MiB -> fits v7x's 64 MiB VMEM with slack.
    per_tile_budget = 8 * 1024 * 1024
    max_tc = max(128, (per_tile_budget // (tb * itemsize)) // 128 * 128)
    tc = L if L <= max_tc else max_tc

    grid = (pl.cdiv(B, tb), pl.cdiv(L, tc))

    # Explicit scoped-VMEM limit: double-buffered x/out tiles + pe row + slack.
    tile_bytes = tb * tc * itemsize
    vmem_limit = int(min(64 * 1024 * 1024,
                         max(16 * 1024 * 1024,
                             4 * tile_bytes + 2 * tc * itemsize + (4 << 20))))

    out2 = pl.pallas_call(
        _add_pe_kernel,
        out_shape=jax.ShapeDtypeStruct((B, L), dtype),
        grid_spec=pltpu.PrefetchScalarGridSpec(
            num_scalar_prefetch=0,
            grid=grid,
            in_specs=[
                pl.BlockSpec((tb, tc), lambda i, j: (i, j)),   # x tile
                pl.BlockSpec((1, tc), lambda i, j: (0, j)),    # pe row (shared)
            ],
            out_specs=pl.BlockSpec((tb, tc), lambda i, j: (i, j)),
        ),
        compiler_params=pltpu.CompilerParams(
            dimension_semantics=("parallel", "parallel"),
            vmem_limit_bytes=vmem_limit),
    )(x2, pe_row)

    return out2.reshape(B, T, size)


def positional_encoding_penalty(pe: jax.Array) -> jax.Array:
    # Training-time regularizer (pe.norm(2, dim=-1).mean()); trivial reduction,
    # left in pure JAX -- not worth a kernel.
    return jnp.linalg.norm(pe.astype(jnp.float32), ord=2, axis=-1).mean()


def init_positional_encoding(key, size: int, num_pos: int, init: str = "zeros"):
    """Matches PositionalEncoding.__init__ ('zeros' or 'norm0.02')."""
    if init == "zeros":
        return jnp.zeros((1, num_pos, size), jnp.float32)
    return jax.random.normal(key, (1, num_pos, size), dtype=jnp.float32) * 0.02


def _reference(x: jax.Array, pe: jax.Array) -> jax.Array:
    """Pure-JAX reference mirroring the PyTorch forward exactly."""
    T = x.shape[1]
    return x + pe[:, :T, :].astype(x.dtype)


if __name__ == "__main__":
    key = jax.random.PRNGKey(0)
    k_pe, k_x1, k_x2 = jax.random.split(key, 3)

    # Small shapes consistent with the module: batch=2, seq=8, hidden=32.
    B, T, SIZE, NUM_POS = 2, 8, 32, 16
    pe = init_positional_encoding(k_pe, SIZE, NUM_POS, init="norm0.02")

    # Case 1: x shorter than num_pos (exercises the pe[:, :T, :] slice).
    x1 = jax.random.normal(k_x1, (B, T, SIZE), dtype=jnp.float32)
    out1 = jax.block_until_ready(positional_encoding_forward(x1, pe))
    assert out1.shape == (B, T, SIZE)
    assert jnp.allclose(out1, _reference(x1, pe), atol=1e-6, rtol=1e-6)

    # Case 2: x uses all num_pos positions.
    x2 = jax.random.normal(k_x2, (B, NUM_POS, SIZE), dtype=jnp.float32)
    out2 = jax.block_until_ready(positional_encoding_forward(x2, pe))
    assert out2.shape == (B, NUM_POS, SIZE)
    assert jnp.allclose(out2, _reference(x2, pe), atol=1e-6, rtol=1e-6)

    # penalty() sanity check (pure JAX path).
    _ = jax.block_until_ready(positional_encoding_penalty(pe))

    print("KERNEL_OK")
</pallas_src>

<mosaic_0001>
module attributes {stable_mosaic.version = 11 : i64} {
  func.func @_add_pe_kernel(%arg0: i32, %arg1: i32, %arg2: memref<2x256xf32, #tpu.memory_space<vmem>>, %arg3: memref<1x256xf32, #tpu.memory_space<vmem>>, %arg4: memref<2x256xf32, #tpu.memory_space<vmem>>) attributes {dimension_semantics = [#tpu.dimension_semantics<parallel>, #tpu.dimension_semantics<parallel>], iteration_bounds = array<i64: 1, 1>, scalar_prefetch = 0 : i64, scratch_operands = 0 : i64, tpu.core_type = #tpu.core_type<tc>, window_params = [{transform_indices = @transform_0, window_bounds = array<i64: 2, 256>}, {transform_indices = @transform_1, window_bounds = array<i64: 1, 256>}, {transform_indices = @transform_2, window_bounds = array<i64: 2, 256>}]} {
    %c0 = arith.constant 0 : index
    %c0_0 = arith.constant 0 : index
    %0 = vector.load %arg2[%c0, %c0_0] : memref<2x256xf32, #tpu.memory_space<vmem>>, vector<2x256xf32>
    %c0_1 = arith.constant 0 : index
    %c0_2 = arith.constant 0 : index
    %1 = vector.load %arg3[%c0_1, %c0_2] : memref<1x256xf32, #tpu.memory_space<vmem>>, vector<1x256xf32>
    %2 = vector.broadcast %1 : vector<1x256xf32> to vector<2x256xf32>
    %3 = arith.addf %0, %2 : vector<2x256xf32>
    %c0_3 = arith.constant 0 : index
    %c0_4 = arith.constant 0 : index
    %4 = vector.load %arg4[%c0_3, %c0_4] : memref<2x256xf32, #tpu.memory_space<vmem>>, vector<2x256xf32>
    tpu.vector_store %arg4[%c0_3, %c0_4], %3 {strides = array<i32>} : memref<2x256xf32, #tpu.memory_space<vmem>>, vector<2x256xf32>,
    return
  }
  func.func @transform_0(%arg0: i32, %arg1: i32) -> (i32, i32) {
    %c0_i32 = arith.constant 0 : i32
    return %arg0, %arg1 : i32, i32
  }
  func.func @transform_1(%arg0: i32, %arg1: i32) -> (i32, i32) {
    %c0_i32 = arith.constant 0 : i32
    %c0_i32_0 = arith.constant 0 : i32
    return %c0_i32, %arg1 : i32, i32
  }
  func.func @transform_2(%arg0: i32, %arg1: i32) -> (i32, i32) {
    %c0_i32 = arith.constant 0 : i32
    return %arg0, %arg1 : i32, i32
  }
}

</mosaic_0001>

<llo_original>
// kernel: tpu_custom_call.1
$region0: #{tpu_custom_call.1}
  #allocation0 [shape = 'u32[]', space=smem, size = 0x4, offset = 0x4, fixed_abs, tag = 'smem constant byte address 0x4 - core index']
  #allocation1 [shape = 'u32[144,128]{1,0:T(1,128)}', space=vmem, size = 0x12000, scoped, tag = 'internal scratch']
  %s0 = inlined_call_operand.hbm [shape: f32[2,256], index: 0, kind: input, shape index: {}]
  %s1 = inlined_call_operand.vmem [shape: f32[1,256], index: 1, kind: input, shape index: {}]
  %s2 = inlined_call_operand.hbm [shape: f32[2,256], index: 2, kind: output, shape index: {}]
  %s3 = sld [smem:[#allocation0]]
  $region22: #{tpu_custom_call.1} parent=0
    _
  %s5 = ssub.s32 1, %s3
  %s6 = scalar_select 0, %s5, %s3
  $region1: #{tpu_custom_call.1} parent=0
    #allocation2 [shape = 'u8[2048]{0}', space=vmem, size = 0x800, scoped, tag = 'input window, operand 0, single buffered']
    #allocation3 [shape = 's32[1]{0}', space=sflag, size = 0x4, scoped, tag = 'scoped memory for tpu_custom_call.1']
    #allocation4 [shape = 's32[1]{0}', space=sflag, size = 0x4, scoped, tag = 'scoped memory for tpu_custom_call.1']
    #allocation5 [shape = 'u8[2048]{0}', space=vmem, size = 0x800, scoped, tag = 'output window, operand 0, single buffered']
    %7 = vsyncpa [#allocation3], 0
    %8 = vsyncpa [#allocation4], 0
    // Predicated region
    $region2: #{tpu_custom_call.1} parent=1 // pred_check
      _
    $region3: #{tpu_custom_call.1} parent=1 // pred_check_branch
      %10 = sbr.rel (0) target = $region5
    $region4: #{tpu_custom_call.1} parent=1 // pred_region
      %s12 = ssub.s32 64, 64
      %13 = vsyncadd [#allocation3], %s12
      %s15 = sshll.u32 [#allocation2], 4
      %s16 = int_to_ptr.vmem [resolvable:$true] %s15
      %18 = dma.hbm_to_vmem [thread:$0]  %s0, 64, %s16, [#allocation3]
    $region5: #{tpu_custom_call.1} parent=1 // pred_fallthru
      _
    // Predicated region
    $region6: #{tpu_custom_call.1} parent=1 // pred_check
      _
    $region7: #{tpu_custom_call.1} parent=1 // pred_check_branch
      %20 = sbr.rel (0) target = $region9
    $region8: #{tpu_custom_call.1} parent=1 // pred_region
      _
    $region9: #{tpu_custom_call.1} parent=1 // pred_fallthru
      _
    // Predicated region
    $region10: #{tpu_custom_call.1} parent=1 // pred_check
      _
    $region11: #{tpu_custom_call.1} parent=1 // pred_check_branch
      %22 = sbr.rel (0) target = $region13
    $region12: #{tpu_custom_call.1} parent=1 // pred_region
      %23 = dma.done [#allocation3], 64
    $region13: #{tpu_custom_call.1} parent=1 // pred_fallthru
      _
    %v24 = vld [vmem:[#allocation2] sm:$0xf]
    %v25 = vld [vmem:[%s1] sm:$0x3]
    %v27 = vlaneseq
    %v28 = vshrl.u32 %v27, 7
    %v29 = vsub.s32 0, %v28
    %v30 = vrot.slane %v25, %v29
    %v31 = vlaneseq
    %v32 = vshrl.u32 %v31, 7
    %v33 = vsub.s32 1, %v32
    %v34 = vrot.slane %v25, %v33
    %v35 = vcombine.low %v30, %v34
    %v37 = vunpack.c.l.s4 1983009808
    %v38 = vunpack.c.0.s8 %v37
    %v39 = vlaneseq
    %v40 = vshrl.u32 %v39, 7
    %v41 = vsub.s32 %v38, %v40
    %v42 = vrot.slane %v35, %v41
    %v44 = vadd.f32 %v24, %v42
    %45 = vst [vmem:[#allocation5] sm:$0xf] %v44
    // Predicated region
    $region14: #{tpu_custom_call.1} parent=1 // pred_check
      _
    $region15: #{tpu_custom_call.1} parent=1 // pred_check_branch
      %47 = sbr.rel (0) target = $region17
    $region16: #{tpu_custom_call.1} parent=1 // pred_region
      %s49 = ssub.s32 64, 64
      %50 = vsyncadd [#allocation4], %s49
      %s52 = sshll.u32 [#allocation5], 4
      %s53 = int_to_ptr.vmem [resolvable:$true] %s52
      %55 = dma.vmem_to_hbm [thread:$0]  %s53, 64, %s2, [#allocation4]
    $region17: #{tpu_custom_call.1} parent=1 // pred_fallthru
      _
    // Predicated region
    $region18: #{tpu_custom_call.1} parent=1 // pred_check
      _
    $region19: #{tpu_custom_call.1} parent=1 // pred_check_branch
      %57 = sbr.rel (0) target = $region21
    $region20: #{tpu_custom_call.1} parent=1 // pred_region
      %58 = dma.done [#allocation4], 64
    $region21: #{tpu_custom_call.1} parent=1 // pred_fallthru
      _
    %59 = vsyncpa [#allocation3], 1
    %60 = vsyncpa [#allocation4], 1

</llo_original>
